<compile_context>
chip_gen: v7x
topology: tpu7x:2x2x1
jax: 0.10.0
libtpu: 0.0.40
codegen_flags: <defaults>
</compile_context>

<pallas_src>
import functools

import jax
import jax.numpy as jnp
from jax.experimental import pallas as pl
from jax.experimental.pallas import tpu as pltpu

# ---- deterministic "perturbation_params" (synthetic, no checkpoint) ----
LP_STYLE = "inf"
LP_BOUND = 0.1

DELTA_SHAPE = (1, 3, 256, 128)  # from DeltaAddition.setup()


def _interp_matrix_align_corners(out_size: int, in_size: int) -> jnp.ndarray:
    """Dense (out_size, in_size) matrix M s.t. M @ v == bilinear-resize(v) along one axis
    with align_corners=True (PyTorch F.interpolate semantics)."""
    if out_size == 1:
        pos = jnp.zeros((1,), jnp.float32)
    else:
        pos = jnp.arange(out_size, dtype=jnp.float32) * (
            (in_size - 1) / (out_size - 1)
        )
    i0 = jnp.clip(jnp.floor(pos).astype(jnp.int32), 0, in_size - 1)
    i1 = jnp.minimum(i0 + 1, in_size - 1)
    w1 = pos - i0.astype(jnp.float32)
    w0 = 1.0 - w1
    cols = jnp.arange(in_size, dtype=jnp.int32)
    m = w0[:, None] * (cols[None, :] == i0[:, None]).astype(jnp.float32) + w1[
        :, None
    ] * (cols[None, :] == i1[:, None]).astype(jnp.float32)
    return m.astype(jnp.float32)


def _pick_tile(total: int, quantum: int, cap: int) -> int:
    """Largest multiple of `quantum` that divides `total` and is <= cap.
    Falls back to the full extent when `total` is not a multiple of `quantum`
    (allowed by the 'block equals full array dim' rule)."""
    if total % quantum != 0:
        return total
    units = total // quantum
    for m in range(min(units, max(cap // quantum, 1)), 0, -1):
        if units % m == 0:
            return m * quantum
    return quantum


# ---------------- Phase 1: once-per-channel noise (constrain + bilinear resize) --------
def _noise_kernel(delta_ref, ly_ref, lxt_ref, noise_ref, *, lp_bound):
    # constrain_params(): L-inf projection of delta onto the threat-model ball.
    d = jnp.clip(delta_ref[...], -lp_bound, lp_bound)                       # (Hin, Win)
    # Separable bilinear (align_corners=True) resize as two MXU matmuls.
    t = jnp.dot(ly_ref[...], d, preferred_element_type=jnp.float32)        # (H, Win)
    noise_ref[...] = jnp.dot(t, lxt_ref[...],
                             preferred_element_type=jnp.float32)           # (H, W)


# ---------------- Phase 2: streaming add + clamp over lane-dense layout ----------------
def _add_clamp_kernel(x_ref, noise_ref, o_ref):
    # x_ref: (TN, TL), noise_ref: (1, TL) -> broadcast over batch rows.
    o_ref[...] = jnp.clip(x_ref[...] + noise_ref[...], 0.0, 1.0)


def delta_addition_forward(
    x: jnp.ndarray,
    delta: jnp.ndarray,
    *,
    lp_bound: float = LP_BOUND,
    donate_x: bool = False,
) -> jnp.ndarray:
    """x: (N, C, H, W) float32 in NCHW; delta: (1, C, Hin, Win) float32."""
    n, c, h, w = x.shape
    _, dc, hin, win = delta.shape
    assert dc == c, "delta channel count must match x"

    x = x.astype(jnp.float32)
    ly = _interp_matrix_align_corners(h, hin)                    # (H, Hin)
    lxt = _interp_matrix_align_corners(w, win).T                 # (Win, W)

    # --- prologue: noise (C, H, W), computed once (tiny vs HBM traffic of x) ---
    noise = pl.pallas_call(
        functools.partial(_noise_kernel, lp_bound=lp_bound),
        out_shape=jax.ShapeDtypeStruct((c, h, w), jnp.float32),
        grid=(c,),
        in_specs=[
            pl.BlockSpec((None, hin, win), lambda ci: (ci, 0, 0)),   # delta (channel-sliced)
            pl.BlockSpec((h, hin), lambda ci: (0, 0)),               # Ly   (resident)
            pl.BlockSpec((win, w), lambda ci: (0, 0)),               # Lx^T (resident)
        ],
        out_specs=pl.BlockSpec((None, h, w), lambda ci: (ci, 0, 0)),
        compiler_params=pltpu.CompilerParams(
            dimension_semantics=("arbitrary",),
        ),
    )(delta.reshape(c, hin, win), ly, lxt)

    # --- streaming add + clamp: lane-dense flattened layout (free reshapes) ---
    l = c * h * w
    x2 = x.reshape(n, l)                      # (N, C*H*W)  -- contiguous, no data movement
    noise2 = noise.reshape(1, l)              # (1, C*H*W)

    tn = _pick_tile(n, 8, 32)                 # batch-row tile (multiple of 8 or full N)
    tl = _pick_tile(l, 128, 8192)             # lane tile (multiple of 128 or full C*H*W)
    # VMEM per step: (x + out double-buffered + noise) ~= 4*TN*TL*4B + 2*TL*4B
    # <= ~4.2 MiB at the caps -> comfortably under v5e's 16 MiB scoped default and
    # v7x's smaller VMEM, while each block is big enough (~1 MiB) to hit HBM roofline.

    extra = {"input_output_aliases": {0: 0}} if donate_x else {}
    out2 = pl.pallas_call(
        _add_clamp_kernel,
        out_shape=jax.ShapeDtypeStruct((n, l), jnp.float32),
        grid=(n // tn, l // tl),
        in_specs=[
            pl.BlockSpec((tn, tl), lambda ni, li: (ni, li)),     # x tile
            pl.BlockSpec((1, tl), lambda ni, li: (0, li)),       # noise tile (batch-bcast)
        ],
        out_specs=pl.BlockSpec((tn, tl), lambda ni, li: (ni, li)),
        compiler_params=pltpu.CompilerParams(
            dimension_semantics=("parallel", "parallel"),        # megacore-friendly on v7x
        ),
        **extra,
    )(x2, noise2)

    return out2.reshape(n, c, h, w)


def _reference_forward(x, delta):
    """Pure-JAX reference (same math, no Pallas) for a sanity check."""
    n, c, h, w = x.shape
    _, _, hin, win = delta.shape
    ly = _interp_matrix_align_corners(h, hin)
    lx = _interp_matrix_align_corners(w, win)
    d = jnp.clip(delta[0], -LP_BOUND, LP_BOUND)                   # (C, Hin, Win)
    noise = jnp.einsum("hi,ciw,wj->chj", ly, d, lx.T)             # (C, H, W)
    return jnp.clip(x + noise[None], 0.0, 1.0)


if __name__ == "__main__":
    key = jax.random.PRNGKey(0)
    kx, kd = jax.random.split(key)

    N, C, H, W = 2, 3, 16, 16
    x = jax.random.uniform(kx, (N, C, H, W), dtype=jnp.float32)            # images in [0, 1]
    # Deterministic non-trivial delta parameter (exceeds lp_bound so projection matters).
    delta = jax.random.uniform(
        kd, DELTA_SHAPE, dtype=jnp.float32, minval=-0.3, maxval=0.3
    )

    out = delta_addition_forward(x, delta)
    out = jax.block_until_ready(out)

    ref = _reference_forward(x, delta)
    assert out.shape == (N, C, H, W)
    assert jnp.allclose(out, ref, atol=1e-5, rtol=1e-5), "mismatch vs reference"

    print("KERNEL_OK")
</pallas_src>

<mosaic_0001>
module attributes {stable_mosaic.version = 11 : i64} {
  func.func @_noise_kernel(%arg0: i32, %arg1: memref<1x256x128xf32, #tpu.memory_space<vmem>>, %arg2: memref<16x256xf32, #tpu.memory_space<vmem>>, %arg3: memref<128x16xf32, #tpu.memory_space<vmem>>, %arg4: memref<1x16x16xf32, #tpu.memory_space<vmem>>) attributes {dimension_semantics = [#tpu.dimension_semantics<arbitrary>], iteration_bounds = array<i64: 3>, scalar_prefetch = 0 : i64, scratch_operands = 0 : i64, tpu.core_type = #tpu.core_type<tc>, window_params = [{transform_indices = @transform_0, window_bounds = array<i64: 1, 256, 128>}, {pipeline_mode = #tpu.pipeline_mode<synchronous>, transform_indices = @transform_1, window_bounds = array<i64: 16, 256>}, {pipeline_mode = #tpu.pipeline_mode<synchronous>, transform_indices = @transform_2, window_bounds = array<i64: 128, 16>}, {transform_indices = @transform_3, window_bounds = array<i64: 1, 16, 16>}]} {
    %c0 = arith.constant 0 : index
    %c0_0 = arith.constant 0 : index
    %c0_1 = arith.constant 0 : index
    %0 = vector.load %arg1[%c0, %c0_0, %c0_1] : memref<1x256x128xf32, #tpu.memory_space<vmem>>, vector<1x256x128xf32>
    %1 = vector.shape_cast %0 : vector<1x256x128xf32> to vector<256x128xf32>
    %cst = arith.constant -1.000000e-01 : f32
    %cst_2 = arith.constant 1.000000e-01 : f32
    %2 = vector.broadcast %cst : f32 to vector<256x128xf32>
    %3 = arith.maximumf %2, %1 : vector<256x128xf32>
    %4 = vector.broadcast %cst_2 : f32 to vector<256x128xf32>
    %5 = arith.minimumf %4, %3 : vector<256x128xf32>
    %c0_3 = arith.constant 0 : index
    %c0_4 = arith.constant 0 : index
    %6 = vector.load %arg2[%c0_3, %c0_4] : memref<16x256xf32, #tpu.memory_space<vmem>>, vector<16x256xf32>
    %cst_5 = arith.constant dense<0.000000e+00> : vector<16x128xf32>
    %7 = tpu.matmul %6, %5, %cst_5 {dimension_numbers = #tpu.dot_dimension_numbers<[1], [0], [0], [1], [0, 0, 1, 1], [], []>} : vector<16x256xf32>, vector<256x128xf32>, vector<16x128xf32> -> vector<16x128xf32>
    %c0_6 = arith.constant 0 : index
    %c0_7 = arith.constant 0 : index
    %8 = vector.load %arg3[%c0_6, %c0_7] : memref<128x16xf32, #tpu.memory_space<vmem>>, vector<128x16xf32>
    %cst_8 = arith.constant dense<0.000000e+00> : vector<16x16xf32>
    %9 = tpu.matmul %7, %8, %cst_8 {dimension_numbers = #tpu.dot_dimension_numbers<[1], [0], [0], [1], [0, 0, 1, 1], [], []>} : vector<16x128xf32>, vector<128x16xf32>, vector<16x16xf32> -> vector<16x16xf32>
    %c0_9 = arith.constant 0 : index
    %c0_10 = arith.constant 0 : index
    %c0_11 = arith.constant 0 : index
    %10 = vector.load %arg4[%c0_9, %c0_10, %c0_11] : memref<1x16x16xf32, #tpu.memory_space<vmem>>, vector<1x16x16xf32>
    %11 = vector.shape_cast %10 : vector<1x16x16xf32> to vector<16x16xf32>
    %12 = vector.shape_cast %9 : vector<16x16xf32> to vector<1x16x16xf32>
    tpu.vector_store %arg4[%c0_9, %c0_10, %c0_11], %12 {strides = array<i32>} : memref<1x16x16xf32, #tpu.memory_space<vmem>>, vector<1x16x16xf32>,
    return
  }
  func.func @transform_0(%arg0: i32) -> (i32, i32, i32) {
    %c0_i32 = arith.constant 0 : i32
    %c0_i32_0 = arith.constant 0 : i32
    %c0_i32_1 = arith.constant 0 : i32
    return %arg0, %c0_i32, %c0_i32_0 : i32, i32, i32
  }
  func.func @transform_1(%arg0: i32) -> (i32, i32) {
    %c0_i32 = arith.constant 0 : i32
    %c0_i32_0 = arith.constant 0 : i32
    %c0_i32_1 = arith.constant 0 : i32
    return %c0_i32, %c0_i32_0 : i32, i32
  }
  func.func @transform_2(%arg0: i32) -> (i32, i32) {
    %c0_i32 = arith.constant 0 : i32
    %c0_i32_0 = arith.constant 0 : i32
    %c0_i32_1 = arith.constant 0 : i32
    return %c0_i32, %c0_i32_0 : i32, i32
  }
  func.func @transform_3(%arg0: i32) -> (i32, i32, i32) {
    %c0_i32 = arith.constant 0 : i32
    %c0_i32_0 = arith.constant 0 : i32
    %c0_i32_1 = arith.constant 0 : i32
    return %arg0, %c0_i32, %c0_i32_0 : i32, i32, i32
  }
}

</mosaic_0001>

<llo_original>
// kernel: tpu_custom_call.1
$region0: #{tpu_custom_call.1}
  #allocation0 [shape = 'u32[]', space=smem, size = 0x4, offset = 0x4, fixed_abs, tag = 'smem constant byte address 0x4 - core index']
  #allocation1 [shape = 'u32[144,128]{1,0:T(1,128)}', space=vmem, size = 0x12000, scoped, tag = 'internal scratch']
  %s0 = inlined_call_operand.hbm [shape: f32[3,256,128], index: 0, kind: input, shape index: {}]
  %s1 = inlined_call_operand.vmem [shape: f32[16,256], index: 1, kind: input, shape index: {}]
  %s2 = inlined_call_operand.vmem [shape: f32[128,16], index: 2, kind: input, shape index: {}]
  %s3 = inlined_call_operand.hbm [shape: f32[3,16,16], index: 3, kind: output, shape index: {}]
  %s4 = sld [smem:[#allocation0]]
  $region49: #{tpu_custom_call.1} parent=0
    _
  %s6 = ssub.s32 1, %s4
  %s7 = scalar_select 0, %s6, %s4
  $region1: #{tpu_custom_call.1} parent=0
    #allocation2 [shape = 'u8[262144]{0}', space=vmem, size = 0x40000, scoped, tag = 'input window, operand 0']
    #allocation3 [shape = 's32[2]{0}', space=sflag, size = 0x8, scoped, tag = 'scoped memory for tpu_custom_call.1']
    #allocation4 [shape = 's32[2]{0}', space=sflag, size = 0x8, scoped, tag = 'scoped memory for tpu_custom_call.1']
    #allocation5 [shape = 'u8[16384]{0}', space=vmem, size = 0x4000, scoped, tag = 'output window, operand 0']
    %8 = vsyncpa [#allocation3], 0
    %s9 = scalar_lea.sflag [#allocation3], 1
    %10 = vsyncpa %s9, 0
    %11 = vsyncpa [#allocation4], 0
    %s12 = scalar_lea.sflag [#allocation4], 1
    %13 = vsyncpa %s12, 0
    loop: start=0, step=1, limit=5
    $region2: #{tpu_custom_call.1} parent=1 // loop_pre_header
      _
    $region3: #{tpu_custom_call.1} parent=1 // loop_header
      %s15 = sphi 0, %s19
      %p16 = scmp.ge.s32.totalorder %s15, 5
      %s25 = sphi 0, %s27
      %s28 = sphi 0, %s25
      %s29 = sphi 0, %s28
      %s45 = sphi 0, %s29
      %s49 = sphi 0, %s49
      %s51 = sphi 0, %s49
      %s52 = sphi 0, %s51
      %s66 = sphi 0, %s52
      %s70 = sphi 0, %s70
      %s72 = sphi 0, %s70
      %s73 = sphi 0, %s72
      %s87 = sphi 0, %s73
      %s93 = sphi 0, %s95
      %s96 = sphi 0, %s93
      %s97 = sphi 0, %s96
      %s113 = sphi 0, %s97
    $region4: #{tpu_custom_call.1} parent=1 // loop_header_branch
      %18 = sbr.rel (%p16) target = $region8
    $region5: #{tpu_custom_call.1} parent=1 // loop_body
      %s20 = ssub.s32 %s15, 1
      %s21 = ssub.s32 %s15, 2
      %s22 = sadd.s32 %s15, 1
      %s23 = ssub.s32 %s15, %s22
      %p24 = scmp.eq.s32.totalorder %s23, 0
      %s26 = sadd.s32 %s25, 1
      %s27 = scalar_select %p24, %s25, %s26
      %p30 = pneg %p24
      %p31 = scmp.eq.s32.totalorder %s15, 2
      %p32 = por %p30, %p31
      %p33 = scmp.ne.s32.totalorder %s25, %s28
      %p34 = scmp.eq.s32.totalorder %s15, 0
      %p35 = por %p33, %p34
      %p36 = scmp.ne.s32.totalorder %s25, %s28
      %p37 = scmp.eq.s32.totalorder %s20, 2
      %p38 = por %p36, %p37
      %p39 = scmp.ne.s32.totalorder %s28, %s29
      %p40 = scmp.eq.s32.totalorder %s20, 0
      %p41 = por %p39, %p40
      %p42 = scmp.ne.s32.totalorder %s28, %s29
      %p43 = scmp.eq.s32.totalorder %s21, 2
      %p44 = por %p42, %p43
      %p46 = scmp.ne.s32.totalorder %s29, %s45
      %p47 = scmp.eq.s32.totalorder %s21, 0
      %p48 = por %p46, %p47
      %s50 = sadd.s32 %s49, 1
      %p53 = scmp.eq.s32.totalorder %s15, 2
      %p54 = scmp.ne.s32.totalorder %s49, %s51
      %p55 = scmp.eq.s32.totalorder %s15, 0
      %p56 = por %p54, %p55
      %p57 = scmp.ne.s32.totalorder %s49, %s51
      %p58 = scmp.eq.s32.totalorder %s20, 2
      %p59 = por %p57, %p58
      %p60 = scmp.ne.s32.totalorder %s51, %s52
      %p61 = scmp.eq.s32.totalorder %s20, 0
      %p62 = por %p60, %p61
      %p63 = scmp.ne.s32.totalorder %s51, %s52
      %p64 = scmp.eq.s32.totalorder %s21, 2
      %p65 = por %p63, %p64
      %p67 = scmp.ne.s32.totalorder %s52, %s66
      %p68 = scmp.eq.s32.totalorder %s21, 0
      %p69 = por %p67, %p68
      %s71 = sadd.s32 %s70, 1
      %p74 = scmp.eq.s32.totalorder %s15, 2
      %p75 = scmp.ne.s32.totalorder %s70, %s72
      %p76 = scmp.eq.s32.totalorder %s15, 0
      %p77 = por %p75, %p76
      %p78 = scmp.ne.s32.totalorder %s70, %s72
      %p79 = scmp.eq.s32.totalorder %s20, 2
      %p80 = por %p78, %p79
      %p81 = scmp.ne.s32.totalorder %s72, %s73
      %p82 = scmp.eq.s32.totalorder %s20, 0
      %p83 = por %p81, %p82
      %p84 = scmp.ne.s32.totalorder %s72, %s73
      %p85 = scmp.eq.s32.totalorder %s21, 2
      %p86 = por %p84, %p85
      %p88 = scmp.ne.s32.totalorder %s73, %s87
      %p89 = scmp.eq.s32.totalorder %s21, 0
      %p90 = por %p88, %p89
      %s91 = ssub.s32 %s15, %s22
      %p92 = scmp.eq.s32.totalorder %s91, 0
      %s94 = sadd.s32 %s93, 1
      %s95 = scalar_select %p92, %s93, %s94
      %p98 = pneg %p92
      %p99 = scmp.eq.s32.totalorder %s15, 2
      %p100 = por %p98, %p99
      %p101 = scmp.ne.s32.totalorder %s93, %s96
      %p102 = scmp.eq.s32.totalorder %s15, 0
      %p103 = por %p101, %p102
      %p104 = scmp.ne.s32.totalorder %s93, %s96
      %p105 = scmp.eq.s32.totalorder %s20, 2
      %p106 = por %p104, %p105
      %p107 = scmp.ne.s32.totalorder %s96, %s97
      %p108 = scmp.eq.s32.totalorder %s20, 0
      %p109 = por %p107, %p108
      %p110 = scmp.ne.s32.totalorder %s96, %s97
      %p111 = scmp.eq.s32.totalorder %s21, 2
      %p112 = por %p110, %p111
      %p114 = scmp.ne.s32.totalorder %s97, %s113
      %p115 = scmp.eq.s32.totalorder %s21, 0
      %p116 = por %p114, %p115
      %p117 = scmp.le.s32.totalorder 1, %s15
      %p118 = scmp.lt.s32.totalorder %s15, 4
      %p119 = pnand %p117, %p118
      %p120 = pneg %p119
      // Predicated region
      $region9: #{tpu_custom_call.1} parent=5 // pred_check
        _
      $region10: #{tpu_custom_call.1} parent=5 // pred_check_branch
        %122 = sbr.rel (%p119) target = $region12
      $region11: #{tpu_custom_call.1} parent=5 // pred_region
        %s123 = ssub.s32 %s15, 1
        // Predicated region
        $region13: #{tpu_custom_call.1} parent=11 // pred_check
          %p124 = pneg %p62
        $region14: #{tpu_custom_call.1} parent=11 // pred_check_branch
          %126 = sbr.rel (%p124) target = $region16
        $region15: #{tpu_custom_call.1} parent=11 // pred_region
          _
        $region16: #{tpu_custom_call.1} parent=11 // pred_fallthru
          _
        // Predicated region
        $region17: #{tpu_custom_call.1} parent=11 // pred_check
          %p127 = pneg %p83
        $region18: #{tpu_custom_call.1} parent=11 // pred_check_branch
          %129 = sbr.rel (%p127) target = $region20
        $region19: #{tpu_custom_call.1} parent=11 // pred_region
          _
        $region20: #{tpu_custom_call.1} parent=11 // pred_fallthru
          _
      $region12: #{tpu_custom_call.1} parent=5 // pred_fallthru
        _
      %p130 = scmp.lt.s32.totalorder %s15, 3
      // Predicated region
      $region21: #{tpu_custom_call.1} parent=5 // pred_check
        %p131 = pneg %p130
      $region22: #{tpu_custom_call.1} parent=5 // pred_check_branch
        %133 = sbr.rel (%p131) target = $region24
      $region23: #{tpu_custom_call.1} parent=5 // pred_region
        // Predicated region
        $region25: #{tpu_custom_call.1} parent=23 // pred_check
          %p134 = pneg %p35
        $region26: #{tpu_custom_call.1} parent=23 // pred_check_branch
          %136 = sbr.rel (%p134) target = $region28
        $region27: #{tpu_custom_call.1} parent=23 // pred_region
          %s137 = sand.u32 %s25, 1
          %s138 = scalar_lea.sflag [#allocation3], %s137
          %s139 = sand.u32 %s25, 1
          %s140 = smul.addr %s139, 256
          %s141 = scalar_lea.vmem [#allocation2], %s140
          %s143 = ssub.s32 4096, 4096
          %144 = vsyncadd %s138, %s143
          %s145 = smul.addr %s15, 32
          %s146 = smul.addr %s145, 128
          %s147 = scalar_lea.hbm %s0, %s146
          %s148 = sshll.u32 %s141, 4
          %s149 = int_to_ptr.vmem [resolvable:$true] %s148
          %154 = dma.hbm_to_vmem [thread:$0]  %s147, 4096, %s149, %s138, 128, 128, 8
        $region28: #{tpu_custom_call.1} parent=23 // pred_fallthru
          _
      $region24: #{tpu_custom_call.1} parent=5 // pred_fallthru
        _
      %p155 = scmp.le.s32.totalorder 1, %s15
      %p156 = scmp.lt.s32.totalorder %s15, 4
      %p157 = pnand %p155, %p156
      %p158 = pneg %p157
      // Predicated region
      $region29: #{tpu_custom_call.1} parent=5 // pred_check
        _
      $region30: #{tpu_custom_call.1} parent=5 // pred_check_branch
        %160 = sbr.rel (%p157) target = $region32
      $region31: #{tpu_custom_call.1} parent=5 // pred_region
        %s161 = ssub.s32 %s15, 1
        %s162 = sand.u32 %s28, 1
        %s163 = scalar_lea.sflag [#allocation3], %s162
        %s164 = sand.u32 %s28, 1
        %s165 = smul.addr %s164, 256
        %s166 = scalar_lea.vmem [#allocation2], %s165
        // Predicated region
        $region33: #{tpu_custom_call.1} parent=31 // pred_check
          %p167 = pneg %p41
        $region34: #{tpu_custom_call.1} parent=31 // pred_check_branch
          %169 = sbr.rel (%p167) target = $region36
        $region35: #{tpu_custom_call.1} parent=31 // pred_region
          %170 = dma.done %s163, 4096
        $region36: #{tpu_custom_call.1} parent=31 // pred_fallthru
          _
        %s171 = sand.u32 %s28, 1
        %s172 = scalar_lea.sflag [#allocation3], %s171
        %s173 = sand.u32 %s28, 1
        %s174 = smul.addr %s173, 256
        %s175 = scalar_lea.vmem [#allocation2], %s174
        %p176 = pneg %p41
        %p177 = pneg %p38
        %p178 = pneg %p62
        %p179 = pneg %p59
        %p180 = pneg %p83
        %p181 = pneg %p80
        %p182 = pneg %p109
        %p183 = pneg %p106
        %s184 = sand.u32 %s96, 1
        %s185 = scalar_lea.sflag [#allocation4], %s184
        %s186 = sand.u32 %s96, 1
        %s187 = smul.addr %s186, 16
        %s188 = scalar_lea.vmem [#allocation5], %s187
        %v189 = vld [vmem:[%s166] sm:$0xff]
        %v190 = vld [vmem:[%s166 + $0x8] sm:$0xff]
        %v191 = vld [vmem:[%s166 + $0x10] sm:$0xff]
        %v192 = vld [vmem:[%s166 + $0x18] sm:$0xff]
        %v193 = vld [vmem:[%s166 + $0x20] sm:$0xff]
        %v194 = vld [vmem:[%s166 + $0x28] sm:$0xff]
        %v195 = vld [vmem:[%s166 + $0x30] sm:$0xff]
        %v196 = vld [vmem:[%s166 + $0x38] sm:$0xff]
        %v197 = vld [vmem:[%s166 + $0x40] sm:$0xff]
        %v198 = vld [vmem:[%s166 + $0x48] sm:$0xff]
        %v199 = vld [vmem:[%s166 + $0x50] sm:$0xff]
        %v200 = vld [vmem:[%s166 + $0x58] sm:$0xff]
        %v201 = vld [vmem:[%s166 + $0x60] sm:$0xff]
        %v202 = vld [vmem:[%s166 + $0x68] sm:$0xff]
        %v203 = vld [vmem:[%s166 + $0x70] sm:$0xff]
        %v204 = vld [vmem:[%s166 + $0x78] sm:$0xff]
        %v205 = vld [vmem:[%s166 + $0x80] sm:$0xff]
        %v206 = vld [vmem:[%s166 + $0x88] sm:$0xff]
        %v207 = vld [vmem:[%s166 + $0x90] sm:$0xff]
        %v208 = vld [vmem:[%s166 + $0x98] sm:$0xff]
        %v209 = vld [vmem:[%s166 + $0xa0] sm:$0xff]
        %v210 = vld [vmem:[%s166 + $0xa8] sm:$0xff]
        %v211 = vld [vmem:[%s166 + $0xb0] sm:$0xff]
        %v212 = vld [vmem:[%s166 + $0xb8] sm:$0xff]
        %v213 = vld [vmem:[%s166 + $0xc0] sm:$0xff]
        %v214 = vld [vmem:[%s166 + $0xc8] sm:$0xff]
        %v215 = vld [vmem:[%s166 + $0xd0] sm:$0xff]
        %v216 = vld [vmem:[%s166 + $0xd8] sm:$0xff]
        %v217 = vld [vmem:[%s166 + $0xe0] sm:$0xff]
        %v218 = vld [vmem:[%s166 + $0xe8] sm:$0xff]
        %v219 = vld [vmem:[%s166 + $0xf0] sm:$0xff]
        %v220 = vld [vmem:[%s166 + $0xf8] sm:$0xff]
        %v221 = vmax.f32 %v189, -0.1
        %v222 = vmax.f32 %v190, -0.1
        %v223 = vmax.f32 %v191, -0.1
        %v224 = vmax.f32 %v192, -0.1
        %v225 = vmax.f32 %v193, -0.1
        %v226 = vmax.f32 %v194, -0.1
        %v227 = vmax.f32 %v195, -0.1
        %v228 = vmax.f32 %v196, -0.1
        %v229 = vmax.f32 %v197, -0.1
        %v230 = vmax.f32 %v198, -0.1
        %v231 = vmax.f32 %v199, -0.1
        %v232 = vmax.f32 %v200, -0.1
        %v233 = vmax.f32 %v201, -0.1
        %v234 = vmax.f32 %v202, -0.1
        %v235 = vmax.f32 %v203, -0.1
        %v236 = vmax.f32 %v204, -0.1
        %v237 = vmax.f32 %v205, -0.1
        %v238 = vmax.f32 %v206, -0.1
        %v239 = vmax.f32 %v207, -0.1
        %v240 = vmax.f32 %v208, -0.1
        %v241 = vmax.f32 %v209, -0.1
        %v242 = vmax.f32 %v210, -0.1
        %v243 = vmax.f32 %v211, -0.1
        %v244 = vmax.f32 %v212, -0.1
        %v245 = vmax.f32 %v213, -0.1
        %v246 = vmax.f32 %v214, -0.1
        %v247 = vmax.f32 %v215, -0.1
        %v248 = vmax.f32 %v216, -0.1
        %v249 = vmax.f32 %v217, -0.1
        %v250 = vmax.f32 %v218, -0.1
        %v251 = vmax.f32 %v219, -0.1
        %v252 = vmax.f32 %v220, -0.1
        %v253 = vmin.f32 %v221, 0.1
        %v254 = vmin.f32 %v222, 0.1
        %v255 = vmin.f32 %v223, 0.1
        %v256 = vmin.f32 %v224, 0.1
        %v257 = vmin.f32 %v225, 0.1
        %v258 = vmin.f32 %v226, 0.1
        %v259 = vmin.f32 %v227, 0.1
        %v260 = vmin.f32 %v228, 0.1
        %v261 = vmin.f32 %v229, 0.1
        %v262 = vmin.f32 %v230, 0.1
        %v263 = vmin.f32 %v231, 0.1
        %v264 = vmin.f32 %v232, 0.1
        %v265 = vmin.f32 %v233, 0.1
        %v266 = vmin.f32 %v234, 0.1
        %v267 = vmin.f32 %v235, 0.1
        %v268 = vmin.f32 %v236, 0.1
        %v269 = vmin.f32 %v237, 0.1
        %v270 = vmin.f32 %v238, 0.1
        %v271 = vmin.f32 %v239, 0.1
        %v272 = vmin.f32 %v240, 0.1
        %v273 = vmin.f32 %v241, 0.1
        %v274 = vmin.f32 %v242, 0.1
        %v275 = vmin.f32 %v243, 0.1
        %v276 = vmin.f32 %v244, 0.1
        %v277 = vmin.f32 %v245, 0.1
        %v278 = vmin.f32 %v246, 0.1
        %v279 = vmin.f32 %v247, 0.1
        %v280 = vmin.f32 %v248, 0.1
        %v281 = vmin.f32 %v249, 0.1
        %v282 = vmin.f32 %v250, 0.1
        %v283 = vmin.f32 %v251, 0.1
        %v284 = vmin.f32 %v252, 0.1
        %v285 = vld [vmem:[%s1] sm:$0xff]
        %v286 = vld [vmem:[%s1 + $0x8] sm:$0xff]
        %v287 = vld [vmem:[%s1 + $0x10] sm:$0xff]
        %v288 = vld [vmem:[%s1 + $0x18] sm:$0xff]
        %289 = vmatprep.subr.mxu0 0.0
        %290 = vmatpush1.msra.mxu0 %v253
        %291 = vmatprep.subr.mxu0 0.0
        %292 = vmatpush1.msra.mxu0 %v254
        %293 = vmatprep.subr.mxu0 0.0
        %294 = vmatpush1.msra.mxu0 %v255
        %295 = vmatprep.subr.mxu0 0.0
        %296 = vmatpush1.msra.mxu0 %v256
        %297 = vmatprep.subr.mxu0 0.0
        %298 = vmatpush1.msra.mxu0 %v257
        %299 = vmatprep.subr.mxu0 0.0
        %300 = vmatpush1.msra.mxu0 %v258
        %301 = vmatprep.subr.mxu0 0.0
        %302 = vmatpush1.msra.mxu0 %v259
        %303 = vmatprep.subr.mxu0 0.0
        %304 = vmatpush1.msra.mxu0 %v260
        %305 = vmatprep.subr.mxu0 0.0
        %306 = vmatpush1.msra.mxu0 %v261
        %307 = vmatprep.subr.mxu0 0.0
        %308 = vmatpush1.msra.mxu0 %v262
        %309 = vmatprep.subr.mxu0 0.0
        %310 = vmatpush1.msra.mxu0 %v263
        %311 = vmatprep.subr.mxu0 0.0
        %312 = vmatpush1.msra.mxu0 %v264
        %313 = vmatprep.subr.mxu0 0.0
        %314 = vmatpush1.msra.mxu0 %v265
        %315 = vmatprep.subr.mxu0 0.0
        %316 = vmatpush1.msra.mxu0 %v266
        %317 = vmatprep.subr.mxu0 0.0
        %318 = vmatpush1.msra.mxu0 %v267
        %319 = vmatprep.subr.mxu0 0.0
        %320 = vmatpush1.msra.mxu0 %v268
        %321 = vmatprep.subr.mxu0 0.0
        %322 = vmatpush1.msra.mxu0 %v269
        %323 = vmatprep.subr.mxu0 0.0
        %324 = vmatpush1.msra.mxu0 %v270
        %325 = vmatprep.subr.mxu0 0.0
        %326 = vmatpush1.msra.mxu0 %v271
        %327 = vmatprep.subr.mxu0 0.0
        %328 = vmatpush1.msra.mxu0 %v272
        %329 = vmatprep.subr.mxu0 0.0
        %330 = vmatpush1.msra.mxu0 %v273
        %331 = vmatprep.subr.mxu0 0.0
        %332 = vmatpush1.msra.mxu0 %v274
        %333 = vmatprep.subr.mxu0 0.0
        %334 = vmatpush1.msra.mxu0 %v275
        %335 = vmatprep.subr.mxu0 0.0
        %336 = vmatpush1.msra.mxu0 %v276
        %337 = vmatprep.subr.mxu0 0.0
        %338 = vmatpush1.msra.mxu0 %v277
        %339 = vmatprep.subr.mxu0 0.0
        %340 = vmatpush1.msra.mxu0 %v278
        %341 = vmatprep.subr.mxu0 0.0
        %342 = vmatpush1.msra.mxu0 %v279
        %343 = vmatprep.subr.mxu0 0.0
        %344 = vmatpush1.msra.mxu0 %v280
        %345 = vmatprep.subr.mxu0 0.0
        %346 = vmatpush1.msra.mxu0 %v281
        %347 = vmatprep.subr.mxu0 0.0
        %348 = vmatpush1.msra.mxu0 %v282
        %349 = vmatprep.subr.mxu0 0.0
        %350 = vmatpush1.msra.mxu0 %v283
        %351 = vmatprep.subr.mxu0 0.0
        %352 = vmatpush1.msra.mxu0 %v284
        %353 = vmatprep.mubr.f32.mxu0 %v286
        %354 = vmatmul.mubr.f32.gmra.mrb[0].mxu0 %v285
        %v355 = vpop.f32.mrb[0].mxu0
        %v356 = vadd.f32 0.0, %v355
        %v357 = vpop.f32.mrb[0].mxu0
        %358 = vmatprep.mubr.f32.mxu0 %v288
        %359 = vmatmul.mubr.f32.gmra.mrb[0].mxu0 %v287
        %v360 = vpop.f32.mrb[0].mxu0
        %v361 = vadd.f32 0.0, %v360
        %v362 = vpop.f32.mrb[0].mxu0
        %363 = vdwg.mxu0
        %v364 = vld [vmem:[%s2] sm:$0xff]
        %v365 = vld [vmem:[%s2 + $0x8] sm:$0xff]
        %v366 = vld [vmem:[%s2 + $0x10] sm:$0xff]
        %v367 = vld [vmem:[%s2 + $0x18] sm:$0xff]
        %v368 = vld [vmem:[%s2 + $0x20] sm:$0xff]
        %v369 = vld [vmem:[%s2 + $0x28] sm:$0xff]
        %v370 = vld [vmem:[%s2 + $0x30] sm:$0xff]
        %v371 = vld [vmem:[%s2 + $0x38] sm:$0xff]
        %v372 = vld [vmem:[%s2 + $0x40] sm:$0xff]
        %v373 = vld [vmem:[%s2 + $0x48] sm:$0xff]
        %v374 = vld [vmem:[%s2 + $0x50] sm:$0xff]
        %v375 = vld [vmem:[%s2 + $0x58] sm:$0xff]
        %v376 = vld [vmem:[%s2 + $0x60] sm:$0xff]
        %v377 = vld [vmem:[%s2 + $0x68] sm:$0xff]
        %v378 = vld [vmem:[%s2 + $0x70] sm:$0xff]
        %v379 = vld [vmem:[%s2 + $0x78] sm:$0xff]
        %380 = vmatprep.subr.mxu0 0.0
        %381 = vmatpush1.msra.mxu0 %v364
        %382 = vmatprep.subr.mxu0 0.0
        %383 = vmatpush1.msra.mxu0 %v365
        %384 = vmatprep.subr.mxu0 0.0
        %385 = vmatpush1.msra.mxu0 %v366
        %386 = vmatprep.subr.mxu0 0.0
        %387 = vmatpush1.msra.mxu0 %v367
        %388 = vmatprep.subr.mxu0 0.0
        %389 = vmatpush1.msra.mxu0 %v368
        %390 = vmatprep.subr.mxu0 0.0
        %391 = vmatpush1.msra.mxu0 %v369
        %392 = vmatprep.subr.mxu0 0.0
        %393 = vmatpush1.msra.mxu0 %v370
        %394 = vmatprep.subr.mxu0 0.0
        %395 = vmatpush1.msra.mxu0 %v371
        %396 = vmatprep.subr.mxu0 0.0
        %397 = vmatpush1.msra.mxu0 %v372
        %398 = vmatprep.subr.mxu0 0.0
        %399 = vmatpush1.msra.mxu0 %v373
        %400 = vmatprep.subr.mxu0 0.0
        %401 = vmatpush1.msra.mxu0 %v374
        %402 = vmatprep.subr.mxu0 0.0
        %403 = vmatpush1.msra.mxu0 %v375
        %404 = vmatprep.subr.mxu0 0.0
        %405 = vmatpush1.msra.mxu0 %v376
        %406 = vmatprep.subr.mxu0 0.0
        %407 = vmatpush1.msra.mxu0 %v377
        %408 = vmatprep.subr.mxu0 0.0
        %409 = vmatpush1.msra.mxu0 %v378
        %410 = vmatprep.subr.mxu0 0.0
        %411 = vmatpush1.msra.mxu0 %v379
        %412 = vmatprep.subr.mxu0 0.0
        %413 = vmatpush1.msra.mxu0 0.0
        %414 = vmatprep.subr.mxu0 0.0
        %415 = vmatpush1.msra.mxu0 0.0
        %416 = vmatprep.subr.mxu0 0.0
        %417 = vmatpush1.msra.mxu0 0.0
        %418 = vmatprep.subr.mxu0 0.0
        %419 = vmatpush1.msra.mxu0 0.0
        %420 = vmatprep.subr.mxu0 0.0
        %421 = vmatpush1.msra.mxu0 0.0
        %422 = vmatprep.subr.mxu0 0.0
        %423 = vmatpush1.msra.mxu0 0.0
        %424 = vmatprep.subr.mxu0 0.0
        %425 = vmatpush1.msra.mxu0 0.0
        %426 = vmatprep.subr.mxu0 0.0
        %427 = vmatpush1.msra.mxu0 0.0
        %428 = vmatprep.subr.mxu0 0.0
        %429 = vmatpush1.msra.mxu0 0.0
        %430 = vmatprep.subr.mxu0 0.0
        %431 = vmatpush1.msra.mxu0 0.0
        %432 = vmatprep.subr.mxu0 0.0
        %433 = vmatpush1.msra.mxu0 0.0
        %434 = vmatprep.subr.mxu0 0.0
        %435 = vmatpush1.msra.mxu0 0.0
        %436 = vmatprep.subr.mxu0 0.0
        %437 = vmatpush1.msra.mxu0 0.0
        %438 = vmatprep.subr.mxu0 0.0
        %439 = vmatpush1.msra.mxu0 0.0
        %440 = vmatprep.subr.mxu0 0.0
        %441 = vmatpush1.msra.mxu0 0.0
        %442 = vmatprep.subr.mxu0 0.0
        %443 = vmatpush1.msra.mxu0 0.0
        %444 = vmatprep.mubr.f32.mxu0 0.0
        %445 = vmatmul.mubr.f32.gmra.mrb[0].mxu0 %v356
        %v446 = vpop.f32.mrb[0].mxu0
        %v447 = vadd.f32 0.0, %v446
        %v448 = vpop.f32.mrb[0].mxu0
        %449 = vmatprep.mubr.f32.mxu0 0.0
        %450 = vmatmul.mubr.f32.gmra.mrb[0].mxu0 %v361
        %v451 = vpop.f32.mrb[0].mxu0
        %v452 = vadd.f32 0.0, %v451
        %v453 = vpop.f32.mrb[0].mxu0
        %454 = vdwg.mxu0
        %vm455 = vcmask 130048
        %456 = vst.msk [vmem:[%s188] sm:$0xff] %vm455, %v447
        %457 = vst.msk [vmem:[%s188 + $0x8] sm:$0xff] %vm455, %v452
        %s458 = sand.u32 %s96, 1
        %s459 = scalar_lea.sflag [#allocation4], %s458
        %s460 = sand.u32 %s96, 1
        %s461 = smul.addr %s460, 16
        %s462 = scalar_lea.vmem [#allocation5], %s461
        // Predicated region
        $region37: #{tpu_custom_call.1} parent=31 // pred_check
          %p463 = pneg %p106
        $region38: #{tpu_custom_call.1} parent=31 // pred_check_branch
          %465 = sbr.rel (%p463) target = $region40
        $region39: #{tpu_custom_call.1} parent=31 // pred_region
          %s467 = ssub.s32 256, 256
          %468 = vsyncadd %s459, %s467
          %s469 = smul.addr %s20, 2
          %s470 = smul.addr %s469, 128
          %s471 = scalar_lea.hbm %s3, %s470
          %s472 = sshll.u32 %s462, 4
          %s473 = int_to_ptr.vmem [resolvable:$true] %s472
          %478 = dma.vmem_to_hbm [thread:$0]  %s473, 256, %s471, %s459, 128, 128, 8
        $region40: #{tpu_custom_call.1} parent=31 // pred_fallthru
          _
      $region32: #{tpu_custom_call.1} parent=5 // pred_fallthru
        _
      %p479 = scmp.le.s32.totalorder 2, %s15
      // Predicated region
      $region41: #{tpu_custom_call.1} parent=5 // pred_check
        %p480 = pneg %p479
      $region42: #{tpu_custom_call.1} parent=5 // pred_check_branch
        %482 = sbr.rel (%p480) target = $region44
      $region43: #{tpu_custom_call.1} parent=5 // pred_region
        %s483 = ssub.s32 %s15, 2
        // Predicated region
        $region45: #{tpu_custom_call.1} parent=43 // pred_check
          %p484 = pneg %p112
        $region46: #{tpu_custom_call.1} parent=43 // pred_check_branch
          %486 = sbr.rel (%p484) target = $region48
        $region47: #{tpu_custom_call.1} parent=43 // pred_region
          %s487 = sand.u32 %s97, 1
          %s488 = scalar_lea.sflag [#allocation4], %s487
          %s489 = sand.u32 %s97, 1
          %s490 = smul.addr %s489, 16
          %s491 = scalar_lea.vmem [#allocation5], %s490
          %492 = dma.done %s488, 256
        $region48: #{tpu_custom_call.1} parent=43 // pred_fallthru
          _
      $region44: #{tpu_custom_call.1} parent=5 // pred_fallthru
        _
    $region6: #{tpu_custom_call.1} parent=1 // loop_footer
      %s19 = sadd.s32 1, %s15
    $region7: #{tpu_custom_call.1} parent=1 // loop_footer_branch
      %14 = sbr.rel target = $region3
    $region8: #{tpu_custom_call.1} parent=1 // loop_exit
      _
    %493 = vsyncpa [#allocation3], 1
    %s494 = scalar_lea.sflag [#allocation3], 1
    %495 = vsyncpa %s494, 1
    %496 = vsyncpa [#allocation4], 1
    %s497 = scalar_lea.sflag [#allocation4], 1
    %498 = vsyncpa %s497, 1

</llo_original>
